<compile_context>
chip_gen: v6e
topology: v6e:2x2x1
jax: 0.10.0
libtpu: 0.0.40
codegen_flags: <defaults>
</compile_context>

<pallas_src>
import math

import jax
import jax.numpy as jnp
from jax.experimental import pallas as pl
from jax.experimental.pallas import tpu as pltpu


def make_pe_table(max_len: int, d_model: int) -> jnp.ndarray:
    """Sinusoidal positional-encoding table, identical to the PyTorch buffer
    (before the unsqueeze/transpose): shape (max_len, d_model)."""
    position = jnp.arange(max_len, dtype=jnp.float32)[:, None]          # (L, 1)
    div_term = jnp.exp(
        jnp.arange(0, d_model, 2, dtype=jnp.float32)
        * (-math.log(10000.0) / d_model)
    )                                                                    # (D/2,)
    ang = position * div_term                                            # (L, D/2)
    pe = jnp.zeros((max_len, d_model), dtype=jnp.float32)
    pe = pe.at[:, 0::2].set(jnp.sin(ang))
    pe = pe.at[:, 1::2].set(jnp.cos(ang))
    return pe


def _round_up(n: int, m: int) -> int:
    return -(-n // m) * m


def _pos_enc_kernel(x0_ref, x1_ref, w_ref, pe_ref, o_ref):
    # x0_ref, x1_ref : (tile_s, B)       input features, K=2 axis pre-split
    # w_ref          : (2, D)            linear weight, (in x out) layout
    # pe_ref         : (tile_s, D)       positional rows, bias folded in
    # o_ref          : (tile_s, BD_pad)  lane-dense output slab (b-major, d-minor)
    tile_s, B = x0_ref.shape
    D = pe_ref.shape[1]
    BD = B * D
    BD_pad = o_ref.shape[1]

    x0 = x0_ref[...]                 # (tile_s, B)
    x1 = x1_ref[...]
    w0 = w_ref[0:1, :]               # (1, D)  keep 2-D for clean broadcasting
    w1 = w_ref[1:2, :]
    pe = pe_ref[...]                 # (tile_s, D)

    # K=2 contraction as VPU broadcast multiply-adds, one D-wide column group
    # per batch element (B is a small static int; VPU/XLU work sits entirely in
    # the slack of this DMA-bound kernel).
    for b in range(B):
        yb = x0[:, b:b + 1] * w0 + x1[:, b:b + 1] * w1 + pe   # (tile_s, D)
        o_ref[:, b * D:(b + 1) * D] = yb

    # Zero the lane padding (sliced off in the wrapper; only when BD % 128 != 0).
    if BD_pad > BD:
        o_ref[:, BD:] = jnp.zeros((tile_s, BD_pad - BD), o_ref.dtype)


def positional_encoding_forward(x, weight, bias, pe_table):
    """
    x:        (S, B, 1, 2)   seq-major, matching the PyTorch module
    weight:   (2, D)         torch Linear.weight.T
    bias:     (D,)
    pe_table: (max_len, D)
    returns:  (S, B, D)      float32
    """
    S, B, one, two = x.shape
    assert one == 1 and two == 2
    D = weight.shape[1]
    assert pe_table.shape[0] >= S, "pe_table shorter than sequence length"
    assert pe_table.shape[1] == D

    xf = x.reshape(S, B, 2).astype(jnp.float32)
    x0 = xf[:, :, 0]                                    # (S, B)
    x1 = xf[:, :, 1]                                    # (S, B)
    w = weight.astype(jnp.float32)                      # (2, D)
    # Fold the Linear bias into the PE rows once (drops one add + one input DMA).
    pe_b = pe_table[:S].astype(jnp.float32) + bias.astype(jnp.float32)[None, :]

    BD = B * D
    BD_pad = _round_up(BD, 128)     # lane-dense output width
    s8 = _round_up(S, 8)            # sublane-aligned sequence length

    # --- generation-aware VMEM budget (padded tile shapes, double-buffered) ---
    try:
        vmem_cap = int(pltpu.get_tpu_info().vmem_capacity_bytes)
    except Exception:
        vmem_cap = 64 * 1024 * 1024                     # conservative (v7x-sized)
    vmem_limit = min((vmem_cap * 3) // 4, 96 * 1024 * 1024)
    per_set_budget = (vmem_limit * 3) // 8              # x2 buffers -> 75% of limit

    lanes = lambda n: _round_up(n, 128)
    # Per-sequence-row VMEM bytes of one buffer set, counted on *padded* shapes.
    bytes_per_row = 4 * (2 * lanes(B)        # x0 + x1 planes
                         + lanes(D)          # pe rows
                         + BD_pad)           # output slab
    budget_rows = max(8, per_set_budget // bytes_per_row)
    max_tile = max(8, (budget_rows // 8) * 8)
    if s8 >= 16:
        # Keep >= 2 grid steps so both v7x TensorCores get work under
        # dimension_semantics=("parallel",). Harmless on single-TC chips.
        max_tile = min(max_tile, max(8, ((s8 // 2) // 8) * 8))

    # Largest multiple of 8 that divides s8 and fits the budget: no ragged
    # tiles, so no row-slice epilogue unless S itself is not a multiple of 8.
    m = s8 // 8
    tile_s = 8
    for d in range(1, m + 1):
        if m % d == 0 and 8 * d <= max_tile:
            tile_s = 8 * d

    if s8 != S:
        pad = s8 - S
        x0 = jnp.pad(x0, ((0, pad), (0, 0)))
        x1 = jnp.pad(x1, ((0, pad), (0, 0)))
        pe_b = jnp.pad(pe_b, ((0, pad), (0, 0)))

    grid = (s8 // tile_s,)

    cost = pl.CostEstimate(
        flops=4 * S * B * D,
        transcendentals=0,
        bytes_accessed=4 * (S * B * 2 + S * D + S * B * D),
    )

    out2d = pl.pallas_call(
        _pos_enc_kernel,
        out_shape=jax.ShapeDtypeStruct((s8, BD_pad), jnp.float32),
        grid_spec=pl.GridSpec(
            grid=grid,
            in_specs=[
                pl.BlockSpec((tile_s, B), lambda i: (i, 0)),
                pl.BlockSpec((tile_s, B), lambda i: (i, 0)),
                pl.BlockSpec((2, D), lambda i: (0, 0)),
                pl.BlockSpec((tile_s, D), lambda i: (i, 0)),
            ],
            out_specs=pl.BlockSpec((tile_s, BD_pad), lambda i: (i, 0)),
        ),
        compiler_params=pltpu.CompilerParams(
            dimension_semantics=("parallel",),
            vmem_limit_bytes=vmem_limit,
        ),
        cost_estimate=cost,
    )(x0, x1, w, pe_b)

    # Strip padding. Both slices are no-ops (and the reshape is free) when
    # S % 8 == 0 and B*D % 128 == 0 -- the common case for real model shapes.
    out = out2d
    if s8 != S:
        out = out[:S]
    if BD_pad != BD:
        out = out[:, :BD]
    # Dropout(p=0.1) in eval mode is the identity.
    # TODO(synk): training-mode dropout (pltpu.prng_* mask + 1/(1-p) scaling)
    # is not reproduced bit-exactly vs. torch RNG.
    return out.reshape(S, B, D)


def _reference(x, weight, bias, pe_table):
    S, B, _, _ = x.shape
    y = jnp.einsum("sbof,fd->sbod", x, weight) + bias   # Linear(2, D)
    y = y.squeeze(2) + pe_table[:S][:, None, :]
    return y


def _check(S, B, D, max_len, key):
    kx, kw, kb = jax.random.split(key, 3)
    x = jax.random.normal(kx, (S, B, 1, 2), dtype=jnp.float32)
    # torch stores Linear.weight as (D, 2); we keep the transposed (2, D) layout.
    weight = jax.random.normal(kw, (2, D), dtype=jnp.float32) * 0.1
    bias = jax.random.normal(kb, (D,), dtype=jnp.float32) * 0.1
    pe_table = make_pe_table(max_len, D)

    out = positional_encoding_forward(x, weight, bias, pe_table)
    out = jax.block_until_ready(out)
    ref = _reference(x, weight, bias, pe_table)
    if not jnp.allclose(out, ref, atol=1e-5, rtol=1e-5):
        raise AssertionError(
            f"Pallas kernel output mismatch vs. reference (S={S}, B={B}, D={D})"
        )


if __name__ == "__main__":
    key = jax.random.PRNGKey(0)
    k1, k2 = jax.random.split(key)

    # Small shape matching the module (seq=8, batch=2, d_model=32):
    # exercises the lane-padded (B*D=64 -> 128) output path, single tile.
    _check(S=8, B=2, D=32, max_len=64, key=k1)

    # Slightly larger shape: B*D = 256 (lane-aligned, no padding slice) and a
    # multi-tile "parallel" grid.
    _check(S=48, B=4, D=64, max_len=64, key=k2)

    print("KERNEL_OK")
</pallas_src>

<mosaic_0001>
module attributes {stable_mosaic.version = 11 : i64} {
  func.func @_pos_enc_kernel(%arg0: i32, %arg1: memref<8x2xf32, #tpu.memory_space<vmem>>, %arg2: memref<8x2xf32, #tpu.memory_space<vmem>>, %arg3: memref<2x32xf32, #tpu.memory_space<vmem>>, %arg4: memref<8x32xf32, #tpu.memory_space<vmem>>, %arg5: memref<8x128xf32, #tpu.memory_space<vmem>>) attributes {dimension_semantics = [#tpu.dimension_semantics<parallel>], iteration_bounds = array<i64: 1>, scalar_prefetch = 0 : i64, scratch_operands = 0 : i64, tpu.core_type = #tpu.core_type<tc>, window_params = [{transform_indices = @transform_0, window_bounds = array<i64: 8, 2>}, {transform_indices = @transform_1, window_bounds = array<i64: 8, 2>}, {pipeline_mode = #tpu.pipeline_mode<synchronous>, transform_indices = @transform_2, window_bounds = array<i64: 2, 32>}, {transform_indices = @transform_3, window_bounds = array<i64: 8, 32>}, {transform_indices = @transform_4, window_bounds = array<i64: 8, 128>}]} {
    %c0 = arith.constant 0 : index
    %c0_0 = arith.constant 0 : index
    %0 = vector.load %arg1[%c0, %c0_0] : memref<8x2xf32, #tpu.memory_space<vmem>>, vector<8x2xf32>
    %c0_1 = arith.constant 0 : index
    %c0_2 = arith.constant 0 : index
    %1 = vector.load %arg2[%c0_1, %c0_2] : memref<8x2xf32, #tpu.memory_space<vmem>>, vector<8x2xf32>
    %c0_3 = arith.constant 0 : index
    %c0_4 = arith.constant 0 : index
    %2 = vector.load %arg3[%c0_3, %c0_4] : memref<2x32xf32, #tpu.memory_space<vmem>>, vector<1x32xf32>
    %c1 = arith.constant 1 : index
    %c0_5 = arith.constant 0 : index
    %3 = vector.load %arg3[%c1, %c0_5] : memref<2x32xf32, #tpu.memory_space<vmem>>, vector<1x32xf32>
    %c0_6 = arith.constant 0 : index
    %c0_7 = arith.constant 0 : index
    %4 = vector.load %arg4[%c0_6, %c0_7] : memref<8x32xf32, #tpu.memory_space<vmem>>, vector<8x32xf32>
    %5 = vector.extract_strided_slice %0 {offsets = [0, 0], sizes = [8, 1], strides = [1, 1]} : vector<8x2xf32> to vector<8x1xf32>
    %6 = vector.broadcast %5 : vector<8x1xf32> to vector<8x32xf32>
    %7 = vector.broadcast %2 : vector<1x32xf32> to vector<8x32xf32>
    %8 = arith.mulf %6, %7 : vector<8x32xf32>
    %9 = vector.extract_strided_slice %1 {offsets = [0, 0], sizes = [8, 1], strides = [1, 1]} : vector<8x2xf32> to vector<8x1xf32>
    %10 = vector.broadcast %9 : vector<8x1xf32> to vector<8x32xf32>
    %11 = vector.broadcast %3 : vector<1x32xf32> to vector<8x32xf32>
    %12 = arith.mulf %10, %11 : vector<8x32xf32>
    %13 = arith.addf %8, %12 : vector<8x32xf32>
    %14 = arith.addf %13, %4 : vector<8x32xf32>
    %c0_8 = arith.constant 0 : index
    %c0_9 = arith.constant 0 : index
    %15 = vector.load %arg5[%c0_8, %c0_9] : memref<8x128xf32, #tpu.memory_space<vmem>>, vector<8x32xf32>
    tpu.vector_store %arg5[%c0_8, %c0_9], %14 {strides = array<i32>} : memref<8x128xf32, #tpu.memory_space<vmem>>, vector<8x32xf32>,
    %16 = vector.extract_strided_slice %0 {offsets = [0, 1], sizes = [8, 1], strides = [1, 1]} : vector<8x2xf32> to vector<8x1xf32>
    %17 = vector.broadcast %16 : vector<8x1xf32> to vector<8x32xf32>
    %18 = vector.broadcast %2 : vector<1x32xf32> to vector<8x32xf32>
    %19 = arith.mulf %17, %18 : vector<8x32xf32>
    %20 = vector.extract_strided_slice %1 {offsets = [0, 1], sizes = [8, 1], strides = [1, 1]} : vector<8x2xf32> to vector<8x1xf32>
    %21 = vector.broadcast %20 : vector<8x1xf32> to vector<8x32xf32>
    %22 = vector.broadcast %3 : vector<1x32xf32> to vector<8x32xf32>
    %23 = arith.mulf %21, %22 : vector<8x32xf32>
    %24 = arith.addf %19, %23 : vector<8x32xf32>
    %25 = arith.addf %24, %4 : vector<8x32xf32>
    %c0_10 = arith.constant 0 : index
    %c32 = arith.constant 32 : index
    %26 = vector.load %arg5[%c0_10, %c32] : memref<8x128xf32, #tpu.memory_space<vmem>>, vector<8x32xf32>
    tpu.vector_store %arg5[%c0_10, %c32], %25 {strides = array<i32>} : memref<8x128xf32, #tpu.memory_space<vmem>>, vector<8x32xf32>,
    %cst = arith.constant 0.000000e+00 : f32
    %27 = vector.broadcast %cst : f32 to vector<8x64xf32>
    %c0_11 = arith.constant 0 : index
    %c64 = arith.constant 64 : index
    %28 = vector.load %arg5[%c0_11, %c64] : memref<8x128xf32, #tpu.memory_space<vmem>>, vector<8x64xf32>
    tpu.vector_store %arg5[%c0_11, %c64], %27 {strides = array<i32>} : memref<8x128xf32, #tpu.memory_space<vmem>>, vector<8x64xf32>,
    return
  }
  func.func @transform_0(%arg0: i32) -> (i32, i32) {
    %c0_i32 = arith.constant 0 : i32
    %c0_i32_0 = arith.constant 0 : i32
    return %arg0, %c0_i32 : i32, i32
  }
  func.func @transform_1(%arg0: i32) -> (i32, i32) {
    %c0_i32 = arith.constant 0 : i32
    %c0_i32_0 = arith.constant 0 : i32
    return %arg0, %c0_i32 : i32, i32
  }
  func.func @transform_2(%arg0: i32) -> (i32, i32) {
    %c0_i32 = arith.constant 0 : i32
    %c0_i32_0 = arith.constant 0 : i32
    %c0_i32_1 = arith.constant 0 : i32
    return %c0_i32, %c0_i32_0 : i32, i32
  }
  func.func @transform_3(%arg0: i32) -> (i32, i32) {
    %c0_i32 = arith.constant 0 : i32
    %c0_i32_0 = arith.constant 0 : i32
    return %arg0, %c0_i32 : i32, i32
  }
  func.func @transform_4(%arg0: i32) -> (i32, i32) {
    %c0_i32 = arith.constant 0 : i32
    %c0_i32_0 = arith.constant 0 : i32
    return %arg0, %c0_i32 : i32, i32
  }
}

</mosaic_0001>

<llo_original>
// kernel: tpu_custom_call.1
$region0: #{tpu_custom_call.1}
  #allocation0 [shape = 'u32[]', space=smem, size = 0x4, offset = 0x4, fixed_abs, tag = 'smem constant byte address 0x4 - core index']
  #allocation1 [shape = 'u32[144,128]{1,0:T(1,128)}', space=vmem, size = 0x12000, scoped, tag = 'internal scratch']
  %s0 = inlined_call_operand.vmem [shape: f32[8,2], index: 0, kind: input, shape index: {}]
  %s1 = inlined_call_operand.vmem [shape: f32[8,2], index: 1, kind: input, shape index: {}]
  %s2 = inlined_call_operand.vmem [shape: f32[2,32], index: 2, kind: input, shape index: {}]
  %s3 = inlined_call_operand.vmem [shape: f32[8,32], index: 3, kind: input, shape index: {}]
  %s4 = inlined_call_operand.hbm [shape: f32[8,128], index: 4, kind: output, shape index: {}]
  %s5 = sld [smem:[#allocation0]]
  $region26: #{tpu_custom_call.1} parent=0
    _
  %s7 = ssub.s32 1, %s5
  %s8 = scalar_select 0, %s7, %s5
  $region1: #{tpu_custom_call.1} parent=0
    #allocation2 [shape = 'u8[4096]{0}', space=vmem, size = 0x1000, scoped, tag = 'output window, operand 0, single buffered']
    #allocation3 [shape = 's32[1]{0}', space=sflag, size = 0x4, scoped, tag = 'scoped memory for tpu_custom_call.1']
    %9 = vsyncpa [#allocation3], 0
    // Predicated region
    $region2: #{tpu_custom_call.1} parent=1 // pred_check
      _
    $region3: #{tpu_custom_call.1} parent=1 // pred_check_branch
      %11 = sbr.rel (0) target = $region5
    $region4: #{tpu_custom_call.1} parent=1 // pred_region
      _
    $region5: #{tpu_custom_call.1} parent=1 // pred_fallthru
      _
    // Predicated region
    $region6: #{tpu_custom_call.1} parent=1 // pred_check
      _
    $region7: #{tpu_custom_call.1} parent=1 // pred_check_branch
      %13 = sbr.rel (0) target = $region9
    $region8: #{tpu_custom_call.1} parent=1 // pred_region
      _
    $region9: #{tpu_custom_call.1} parent=1 // pred_fallthru
      _
    // Predicated region
    $region10: #{tpu_custom_call.1} parent=1 // pred_check
      _
    $region11: #{tpu_custom_call.1} parent=1 // pred_check_branch
      %15 = sbr.rel (0) target = $region13
    $region12: #{tpu_custom_call.1} parent=1 // pred_region
      _
    $region13: #{tpu_custom_call.1} parent=1 // pred_fallthru
      _
    // Predicated region
    $region14: #{tpu_custom_call.1} parent=1 // pred_check
      _
    $region15: #{tpu_custom_call.1} parent=1 // pred_check_branch
      %17 = sbr.rel (0) target = $region17
    $region16: #{tpu_custom_call.1} parent=1 // pred_region
      _
    $region17: #{tpu_custom_call.1} parent=1 // pred_fallthru
      _
    %v18 = vld [vmem:[%s0] sm:$0xff]
    %v19 = vld [vmem:[%s1] sm:$0xff]
    %v20 = vld [vmem:[%s2] sm:$0x1]
    %v21 = vld [vmem:[%s2 + $0x1] sm:$0x1]
    %v22 = vld [vmem:[%s3] sm:$0xff]
    %24 = vset.pattern.permute.xlu0 0
    %25 = vperm.xlu0 %24, %v18
    %v26 = vpop.permute.xlu0 %25
    %v28 = vlaneseq
    %v29 = vshrl.u32 %v28, 7
    %v30 = vsub.s32 0, %v29
    %v31 = vrot.slane %v20, %v30
    %v32 = vmul.f32 %v26, %v31
    %34 = vset.pattern.permute.xlu0 0
    %35 = vperm.xlu0 %34, %v19
    %v36 = vpop.permute.xlu0 %35
    %v38 = vlaneseq
    %v39 = vshrl.u32 %v38, 7
    %v40 = vsub.s32 0, %v39
    %v41 = vrot.slane %v21, %v40
    %v42 = vmul.f32 %v36, %v41
    %v43 = vadd.f32 %v32, %v42
    %v44 = vadd.f32 %v43, %v22
    %vm45 = vcmask 261120
    %46 = vst.msk [vmem:[#allocation2] sm:$0xff] %vm45, %v44
    %47 = vset.pattern.permute.xlu0 1
    %48 = vperm.xlu0 %47, %v18
    %v49 = vpop.permute.xlu0 %48
    %v51 = vmul.f32 %v49, %v31
    %52 = vset.pattern.permute.xlu0 1
    %53 = vperm.xlu0 %52, %v19
    %v54 = vpop.permute.xlu0 %53
    %v56 = vmul.f32 %v54, %v41
    %v57 = vadd.f32 %v51, %v56
    %v58 = vadd.f32 %v57, %v22
    %60 = vrot.lane.b32.xlu0 %v58, 32
    %v61 = vpop.permute.xlu0 %60
    %vm63 = vcmask 523520
    %64 = vst.msk [vmem:[#allocation2] sm:$0xff] %vm63, %v61
    %vm65 = vcmask 1048064
    %66 = vst.msk [vmem:[#allocation2] sm:$0xff] %vm65, 0.0
    // Predicated region
    $region18: #{tpu_custom_call.1} parent=1 // pred_check
      _
    $region19: #{tpu_custom_call.1} parent=1 // pred_check_branch
      %68 = sbr.rel (0) target = $region21
    $region20: #{tpu_custom_call.1} parent=1 // pred_region
      %s70 = ssub.s32 128, 128
      %71 = vsyncadd [#allocation3], %s70
      %s73 = sshll.u32 [#allocation2], 4
      %s74 = int_to_ptr.vmem [resolvable:$true] %s73
      %76 = dma.vmem_to_hbm [thread:$0]  %s74, 128, %s4, [#allocation3]
    $region21: #{tpu_custom_call.1} parent=1 // pred_fallthru
      _
    // Predicated region
    $region22: #{tpu_custom_call.1} parent=1 // pred_check
      _
    $region23: #{tpu_custom_call.1} parent=1 // pred_check_branch
      %78 = sbr.rel (0) target = $region25
    $region24: #{tpu_custom_call.1} parent=1 // pred_region
      %79 = dma.done [#allocation3], 128
    $region25: #{tpu_custom_call.1} parent=1 // pred_fallthru
      _
    %80 = vsyncpa [#allocation3], 1

</llo_original>
